<compile_context>
chip_gen: v7x
topology: tpu7x:2x2x1
jax: 0.10.0
libtpu: 0.0.40
codegen_flags: <defaults>
</compile_context>

<pallas_src>
import math

import jax
import jax.numpy as jnp
from jax.experimental import pallas as pl
from jax.experimental.pallas import tpu as pltpu


# --------------------------------------------------------------------------- #
# Quantization helpers
# --------------------------------------------------------------------------- #
def quantize_weight_reference(w, bits):
    """Symmetric per-tensor uniform quantization (stand-in for Quant(bits))."""
    half_lvls = (2.0 ** bits - 2.0) / 2.0
    max_abs = jnp.max(jnp.abs(w))
    step = jnp.where(max_abs > 0.0, max_abs / half_lvls, 1.0)
    return jnp.clip(jnp.round(w / step), -half_lvls, half_lvls) * step


def _quantize_pack_weight(weight, bits, compute_dtype):
    """Quantize `weight` (out, in) and pack it for the kernel.

    Returns (w_packed, step) where w_packed is laid out (in, out) == (K, N) so
    the kernel runs the canonical (tm,tk)x(tk,tn) MXU contraction with no
    in-kernel transpose.  For bits <= 8 the integer levels are stored as int8
    (4x less weight HBM traffic) and `step` is applied in the kernel epilogue;
    otherwise the dequantized weight is stored in compute_dtype and step == 1.
    """
    half_lvls = (2.0 ** bits - 2.0) / 2.0
    max_abs = jnp.max(jnp.abs(weight)).astype(jnp.float32)
    # Guard against an all-zero weight (step == 0 -> NaN).
    step = jnp.where(max_abs > 0.0, max_abs / half_lvls, 1.0).astype(jnp.float32)
    q = jnp.clip(jnp.round(weight.astype(jnp.float32) / step),
                 -half_lvls, half_lvls)
    if bits <= 8:
        w_packed = q.astype(jnp.int8).T                  # (K, N) integer levels
        scale = step
    else:
        # TODO(synk): >8-bit levels do not fit int8; fall back to dequantized values.
        w_packed = (q * step).astype(compute_dtype).T    # (K, N)
        scale = jnp.float32(1.0)
    return w_packed, scale.reshape(1, 1)


# --------------------------------------------------------------------------- #
# Kernels
# --------------------------------------------------------------------------- #
def _qlinear_kernel_bias(step_ref, x_ref, w_ref, b_ref, o_ref, acc_ref):
    """y = (x @ w_int) * step + bias   with f32 K-reduction accumulator.

    step_ref: (1, 1)   f32 per-tensor scale (SMEM)
    x_ref:    (tm, tk) activation tile (compute dtype)
    w_ref:    (tk, tn) weight tile (int8 levels or compute dtype)
    b_ref:    (1, tn)  f32 bias tile
    o_ref:    (tm, tn) output tile
    acc_ref:  (tm, tn) f32 accumulator (VMEM scratch)
    """
    k = pl.program_id(2)

    @pl.when(k == 0)
    def _():
        acc_ref[...] = jnp.zeros_like(acc_ref)

    # int8 -> compute dtype dequant on the VPU; canonical K-on-sublanes RHS.
    acc_ref[...] += jnp.dot(x_ref[...], w_ref[...].astype(x_ref.dtype),
                            preferred_element_type=jnp.float32)

    @pl.when(k == pl.num_programs(2) - 1)
    def _():
        y = acc_ref[...] * step_ref[0, 0] + b_ref[...]
        o_ref[...] = y.astype(o_ref.dtype)


def _qlinear_kernel_nobias(step_ref, x_ref, w_ref, o_ref, acc_ref):
    k = pl.program_id(2)

    @pl.when(k == 0)
    def _():
        acc_ref[...] = jnp.zeros_like(acc_ref)

    acc_ref[...] += jnp.dot(x_ref[...], w_ref[...].astype(x_ref.dtype),
                            preferred_element_type=jnp.float32)

    @pl.when(k == pl.num_programs(2) - 1)
    def _():
        o_ref[...] = (acc_ref[...] * step_ref[0, 0]).astype(o_ref.dtype)


# --------------------------------------------------------------------------- #
# Tiling helpers
# --------------------------------------------------------------------------- #
def _round_up(x, m):
    return ((x + m - 1) // m) * m


def _tile_and_pad(dim, pref, multiple):
    """Pick (tile, padded_dim).

    dim <= pref      -> single full-dim tile (always layout-legal).
    divisor exists   -> largest divisor tile in [pref/2, pref] that is a
                        multiple of `multiple` (no padding).
    otherwise        -> tile = pref, pad dim up to a multiple of it (never a
                        giant full-dimension tile that could blow VMEM).
    """
    if dim <= pref:
        return dim, dim
    t = (pref // multiple) * multiple
    floor = max(multiple, (pref // 2 // multiple) * multiple)
    while t >= floor:
        if dim % t == 0:
            return t, dim
        t -= multiple
    t = (pref // multiple) * multiple
    return t, _round_up(dim, t)


# --------------------------------------------------------------------------- #
# Wrapper
# --------------------------------------------------------------------------- #
def quan_linear_forward(x, weight, bits, bias=None, *,
                        compute_dtype=jnp.bfloat16,
                        tm_pref=512, tn_pref=512, tk_pref=1024):
    """Pallas implementation of quan_Linear.forward.

    x:      (B, S, in_features)
    weight: (out_features, in_features)
    bias:   (out_features,) or None
    returns (B, S, out_features) in x.dtype
    """
    B, S, K = x.shape
    N, K_w = weight.shape
    assert K == K_w, "in_features mismatch"

    out_dtype = x.dtype
    compute_dtype = jnp.dtype(compute_dtype)

    # Parameter-side glue: int8 levels in (K, N) layout + scalar step.
    w_packed, step = _quantize_pack_weight(weight, bits, compute_dtype)

    M = B * S
    x2 = x.reshape(M, K).astype(compute_dtype)

    # --- tile selection ------------------------------------------------------
    pack = {1: 32, 2: 16, 4: 8}.get(compute_dtype.itemsize, 8)  # sublane packing
    if M <= tm_pref:
        tm = _round_up(M, pack)          # single, packing-aligned row tile
        M_pad = tm
    else:
        tm, M_pad = _tile_and_pad(M, tm_pref, 128)
    tn, N_pad = _tile_and_pad(N, tn_pref, 128)
    tk, K_pad = _tile_and_pad(K, tk_pref, 128)

    grid_m = M_pad // tm
    grid_n = N_pad // tn
    grid_k = K_pad // tk

    # v7x megacore: keep >=2 programs on a 'parallel' axis when shapes allow.
    if grid_m == 1 and grid_n == 1 and tn % 256 == 0:
        tn //= 2
        grid_n = N_pad // tn

    # --- padding (zeros on K contribute nothing; padded N sliced off) --------
    if (M_pad, K_pad) != (M, K):
        x2 = jnp.pad(x2, ((0, M_pad - M), (0, K_pad - K)))
    if (K_pad, N_pad) != (K, N):
        w_packed = jnp.pad(w_packed, ((0, K_pad - K), (0, N_pad - N)))

    has_bias = bias is not None

    # --- specs ----------------------------------------------------------------
    in_specs = [
        pl.BlockSpec(memory_space=pltpu.MemorySpace.SMEM),     # per-tensor step
        pl.BlockSpec((tm, tk), lambda i, j, k: (i, k)),        # activations
    ]
    w_spec_kwargs = {}
    if M_pad <= 256 and grid_n * grid_k >= 3:
        # Skinny-M (decode) shapes are weight-DMA bound: deepen the W pipeline.
        w_spec_kwargs["pipeline_mode"] = pl.Buffered(3)
    in_specs.append(pl.BlockSpec((tk, tn), lambda i, j, k: (k, j),
                                 **w_spec_kwargs))             # weight (K, N)

    operands = [step, x2, w_packed]
    if has_bias:
        bias2 = bias.reshape(1, N).astype(jnp.float32)
        if N_pad != N:
            bias2 = jnp.pad(bias2, ((0, 0), (0, N_pad - N)))
        operands.append(bias2)
        in_specs.append(pl.BlockSpec((1, tn), lambda i, j, k: (0, j)))
        kernel = _qlinear_kernel_bias
    else:
        kernel = _qlinear_kernel_nobias

    # --- VMEM budget (clamped to the actual chip capacity, v7x = 64 MiB) -----
    itemsize_c = compute_dtype.itemsize
    itemsize_w = jnp.dtype(w_packed.dtype).itemsize
    itemsize_o = jnp.dtype(out_dtype).itemsize
    w_bufs = 3 if "pipeline_mode" in w_spec_kwargs else 2
    vmem_bytes = (2 * tm * tk * itemsize_c          # double-buffered activations
                  + w_bufs * tk * tn * itemsize_w   # (deep-)buffered weights
                  + 2 * tm * tn * itemsize_o        # double-buffered output
                  + tm * tn * 4                     # f32 accumulator scratch
                  + (2 * tn * 4 if has_bias else 0))
    try:
        vmem_cap = int(pltpu.get_tpu_info().vmem_capacity_bytes)
    except Exception:
        vmem_cap = 64 * 1024 * 1024                 # smallest generation (v7x)
    vmem_limit = int(min(vmem_cap - (4 << 20),
                         max(int(vmem_bytes * 1.5) + (2 << 20), 32 << 20)))

    flops = 2 * M_pad * N_pad * K_pad
    bytes_accessed = (M_pad * K_pad * itemsize_c * grid_n
                      + K_pad * N_pad * itemsize_w * grid_m
                      + M_pad * N_pad * itemsize_o)
    cost = pl.CostEstimate(flops=int(flops), transcendentals=0,
                           bytes_accessed=int(bytes_accessed))

    out = pl.pallas_call(
        kernel,
        out_shape=jax.ShapeDtypeStruct((M_pad, N_pad), out_dtype),
        grid_spec=pltpu.PrefetchScalarGridSpec(
            num_scalar_prefetch=0,
            grid=(grid_m, grid_n, grid_k),
            in_specs=in_specs,
            out_specs=pl.BlockSpec((tm, tn), lambda i, j, k: (i, j)),
            scratch_shapes=[pltpu.VMEM((tm, tn), jnp.float32)],
        ),
        compiler_params=pltpu.CompilerParams(
            dimension_semantics=("parallel", "parallel", "arbitrary"),
            vmem_limit_bytes=vmem_limit,
        ),
        cost_estimate=cost,
    )(*operands)

    y2 = out[:M, :N] if (M_pad, N_pad) != (M, N) else out
    return y2.reshape(B, S, N)


# --------------------------------------------------------------------------- #
# Self-test
# --------------------------------------------------------------------------- #
if __name__ == "__main__":
    # Small shapes consistent with the module's forward: x is (B, S, in_features).
    B, S, in_features, out_features, bits = 2, 8, 32, 32, 8

    key = jax.random.PRNGKey(0)
    kx, kw, kb = jax.random.split(key, 3)
    x = jax.random.normal(kx, (B, S, in_features), dtype=jnp.float32)
    bound = 1.0 / math.sqrt(in_features)
    weight = jax.random.uniform(
        kw, (out_features, in_features), minval=-bound, maxval=bound,
        dtype=jnp.float32,
    )

    # Plain-JAX reference of the exact PyTorch semantics
    # (cumsum over the in dim, last element == sum over the in dim).
    w_q_ref = quantize_weight_reference(weight, bits)
    y_ref = jnp.einsum("bsi,oi->bso", x, w_q_ref)

    # 1) exact-ish path: f32 compute, no bias (quan_Linear default).
    y = jax.block_until_ready(
        quan_linear_forward(x, weight, bits, bias=None,
                            compute_dtype=jnp.float32))
    assert y.shape == (B, S, out_features)
    assert jnp.allclose(y, y_ref, atol=1e-4, rtol=1e-4)

    # 2) fused-bias path (still f32 compute).
    bias = jax.random.normal(kb, (out_features,), dtype=jnp.float32)
    yb = jax.block_until_ready(
        quan_linear_forward(x, weight, bits, bias=bias,
                            compute_dtype=jnp.float32))
    assert jnp.allclose(yb, y_ref + bias[None, None, :], atol=1e-4, rtol=1e-4)

    # 3) default bf16-MXU path (f32 accumulation) — looser tolerance.
    y16 = jax.block_until_ready(quan_linear_forward(x, weight, bits, bias=None))
    assert y16.shape == (B, S, out_features)
    assert jnp.allclose(y16, y_ref, atol=5e-2, rtol=5e-2)

    print("KERNEL_OK")
</pallas_src>

<mosaic_0001>
module attributes {stable_mosaic.version = 11 : i64} {
  func.func @_qlinear_kernel_nobias(%arg0: i32, %arg1: i32, %arg2: i32, %arg3: memref<1x1xf32, #tpu.memory_space<smem>>, %arg4: memref<16x32xf32, #tpu.memory_space<vmem>>, %arg5: memref<32x32xi8, #tpu.memory_space<vmem>>, %arg6: memref<16x32xf32, #tpu.memory_space<vmem>>, %arg7: memref<16x32xf32, #tpu.memory_space<vmem>>) attributes {dimension_semantics = [#tpu.dimension_semantics<parallel>, #tpu.dimension_semantics<parallel>, #tpu.dimension_semantics<arbitrary>], iteration_bounds = array<i64: 1, 1, 1>, scalar_prefetch = 0 : i64, scratch_operands = 1 : i64, tpu.core_type = #tpu.core_type<tc>, window_params = [{transform_indices = @transform_0, window_bounds = array<i64: 1, 1>}, {transform_indices = @transform_1, window_bounds = array<i64: 16, 32>}, {transform_indices = @transform_2, window_bounds = array<i64: 32, 32>}, {transform_indices = @transform_3, window_bounds = array<i64: 16, 32>}]} {
    %c0_i32 = arith.constant 0 : i32
    %0 = arith.cmpi eq, %arg2, %c0_i32 : i32
    %1 = arith.extui %0 : i1 to i32
    %c0_i32_0 = arith.constant 0 : i32
    %2 = arith.cmpi ne, %1, %c0_i32_0 : i32
    scf.if %2 {
      %cst_10 = arith.constant 0.000000e+00 : f32
      %13 = vector.broadcast %cst_10 : f32 to vector<16x32xf32>
      %c0_11 = arith.constant 0 : index
      %c0_12 = arith.constant 0 : index
      %14 = vector.load %arg7[%c0_11, %c0_12] : memref<16x32xf32, #tpu.memory_space<vmem>>, vector<16x32xf32>
      tpu.vector_store %arg7[%c0_11, %c0_12], %13 {strides = array<i32>} : memref<16x32xf32, #tpu.memory_space<vmem>>, vector<16x32xf32>,
    } else {
    }
    %c0 = arith.constant 0 : index
    %c0_1 = arith.constant 0 : index
    %3 = vector.load %arg7[%c0, %c0_1] : memref<16x32xf32, #tpu.memory_space<vmem>>, vector<16x32xf32>
    %c0_2 = arith.constant 0 : index
    %c0_3 = arith.constant 0 : index
    %4 = vector.load %arg4[%c0_2, %c0_3] : memref<16x32xf32, #tpu.memory_space<vmem>>, vector<16x32xf32>
    %c0_4 = arith.constant 0 : index
    %c0_5 = arith.constant 0 : index
    %5 = vector.load %arg5[%c0_4, %c0_5] : memref<32x32xi8, #tpu.memory_space<vmem>>, vector<32x32xi8>
    %6 = arith.sitofp %5 : vector<32x32xi8> to vector<32x32xf32>
    %cst = arith.constant dense<0.000000e+00> : vector<16x32xf32>
    %7 = tpu.matmul %4, %6, %cst {dimension_numbers = #tpu.dot_dimension_numbers<[1], [0], [0], [1], [0, 0, 1, 1], [], []>} : vector<16x32xf32>, vector<32x32xf32>, vector<16x32xf32> -> vector<16x32xf32>
    %8 = arith.addf %3, %7 : vector<16x32xf32>
    %c0_6 = arith.constant 0 : index
    %c0_7 = arith.constant 0 : index
    %9 = vector.load %arg7[%c0_6, %c0_7] : memref<16x32xf32, #tpu.memory_space<vmem>>, vector<16x32xf32>
    tpu.vector_store %arg7[%c0_6, %c0_7], %8 {strides = array<i32>} : memref<16x32xf32, #tpu.memory_space<vmem>>, vector<16x32xf32>,
    %c0_i32_8 = arith.constant 0 : i32
    %10 = arith.cmpi eq, %arg2, %c0_i32_8 : i32
    %11 = arith.extui %10 : i1 to i32
    %c0_i32_9 = arith.constant 0 : i32
    %12 = arith.cmpi ne, %11, %c0_i32_9 : i32
    scf.if %12 {
      %c0_10 = arith.constant 0 : index
      %c0_11 = arith.constant 0 : index
      %13 = vector.load %arg7[%c0_10, %c0_11] : memref<16x32xf32, #tpu.memory_space<vmem>>, vector<16x32xf32>
      %c0_12 = arith.constant 0 : index
      %c0_13 = arith.constant 0 : index
      %14 = memref.load %arg3[%c0_12, %c0_13] : memref<1x1xf32, #tpu.memory_space<smem>>
      %15 = vector.broadcast %14 : f32 to vector<16x32xf32>
      %16 = arith.mulf %13, %15 : vector<16x32xf32>
      %c0_14 = arith.constant 0 : index
      %c0_15 = arith.constant 0 : index
      %17 = vector.load %arg6[%c0_14, %c0_15] : memref<16x32xf32, #tpu.memory_space<vmem>>, vector<16x32xf32>
      tpu.vector_store %arg6[%c0_14, %c0_15], %16 {strides = array<i32>} : memref<16x32xf32, #tpu.memory_space<vmem>>, vector<16x32xf32>,
    } else {
    }
    return
  }
  func.func @transform_0(%arg0: i32, %arg1: i32, %arg2: i32) -> (i32, i32) {
    %c0_i32 = arith.constant 0 : i32
    %c0_i32_0 = arith.constant 0 : i32
    %c0_i32_1 = arith.constant 0 : i32
    return %c0_i32, %c0_i32_0 : i32, i32
  }
  func.func @transform_1(%arg0: i32, %arg1: i32, %arg2: i32) -> (i32, i32) {
    %c0_i32 = arith.constant 0 : i32
    return %arg0, %arg2 : i32, i32
  }
  func.func @transform_2(%arg0: i32, %arg1: i32, %arg2: i32) -> (i32, i32) {
    %c0_i32 = arith.constant 0 : i32
    return %arg2, %arg1 : i32, i32
  }
  func.func @transform_3(%arg0: i32, %arg1: i32, %arg2: i32) -> (i32, i32) {
    %c0_i32 = arith.constant 0 : i32
    return %arg0, %arg1 : i32, i32
  }
}

</mosaic_0001>

<llo_original>
// kernel: tpu_custom_call.1
$region0: #{tpu_custom_call.1}
  #allocation0 [shape = 'u32[]', space=smem, size = 0x4, offset = 0x4, fixed_abs, tag = 'smem constant byte address 0x4 - core index']
  #allocation1 [shape = 'u32[144,128]{1,0:T(1,128)}', space=vmem, size = 0x12000, scoped, tag = 'internal scratch']
  #allocation2 [shape = 'f32[16,32]{1,0:T(8,128)}', space=vmem, size = 0x2000, scoped, tag = 'scratch operand']
  #allocation3 [shape = 'f32[1,1]{1,0:T(1,128)S(6)}', space=smem, size = 0x200, scoped, tag = 'scoped memory for tpu_custom_call.1']
  %s0 = inlined_call_operand.<no memory space> [shape: f32[1,1], index: 0, kind: input, shape index: {}]
  %s1 = inlined_call_operand.hbm [shape: f32[16,32], index: 1, kind: input, shape index: {}]
  %s2 = inlined_call_operand.hbm [shape: s8[32,32], index: 2, kind: input, shape index: {}]
  %s3 = inlined_call_operand.hbm [shape: f32[16,32], index: 3, kind: output, shape index: {}]
  %s4 = sld [smem:[#allocation0]]
  $region38: #{tpu_custom_call.1} parent=0
    _
  %s6 = ssub.s32 1, %s4
  %s7 = scalar_select 0, %s6, %s4
  %8 = sst [smem:[#allocation3]] %s0
  $region1: #{tpu_custom_call.1} parent=0
    #allocation4 [shape = 'u8[8192]{0}', space=vmem, size = 0x2000, scoped, tag = 'input window, operand 1, single buffered']
    #allocation5 [shape = 's32[1]{0}', space=sflag, size = 0x4, scoped, tag = 'scoped memory for tpu_custom_call.1']
    #allocation6 [shape = 's32[1]{0}', space=sflag, size = 0x4, scoped, tag = 'scoped memory for tpu_custom_call.1']
    #allocation7 [shape = 'u8[4096]{0}', space=vmem, size = 0x1000, scoped, tag = 'input window, operand 2, single buffered']
    #allocation8 [shape = 's32[1]{0}', space=sflag, size = 0x4, scoped, tag = 'scoped memory for tpu_custom_call.1']
    #allocation9 [shape = 'u8[8192]{0}', space=vmem, size = 0x2000, scoped, tag = 'output window, operand 0, single buffered']
    %9 = vsyncpa [#allocation5], 0
    %10 = vsyncpa [#allocation8], 0
    %11 = vsyncpa [#allocation6], 0
    // Predicated region
    $region2: #{tpu_custom_call.1} parent=1 // pred_check
      _
    $region3: #{tpu_custom_call.1} parent=1 // pred_check_branch
      %13 = sbr.rel (0) target = $region5
    $region4: #{tpu_custom_call.1} parent=1 // pred_region
      _
    $region5: #{tpu_custom_call.1} parent=1 // pred_fallthru
      _
    // Predicated region
    $region6: #{tpu_custom_call.1} parent=1 // pred_check
      _
    $region7: #{tpu_custom_call.1} parent=1 // pred_check_branch
      %15 = sbr.rel (0) target = $region9
    $region8: #{tpu_custom_call.1} parent=1 // pred_region
      %s17 = ssub.s32 256, 256
      %18 = vsyncadd [#allocation5], %s17
      %s19 = sshll.u32 [#allocation4], 4
      %s20 = int_to_ptr.vmem [resolvable:$true] %s19
      %25 = dma.hbm_to_vmem [thread:$0]  %s1, 256, %s20, [#allocation5], 128, 128, 8
    $region9: #{tpu_custom_call.1} parent=1 // pred_fallthru
      _
    // Predicated region
    $region10: #{tpu_custom_call.1} parent=1 // pred_check
      _
    $region11: #{tpu_custom_call.1} parent=1 // pred_check_branch
      %27 = sbr.rel (0) target = $region13
    $region12: #{tpu_custom_call.1} parent=1 // pred_region
      %s29 = ssub.s32 128, 128
      %30 = vsyncadd [#allocation8], %s29
      %s32 = sshll.u32 [#allocation7], 4
      %s33 = int_to_ptr.vmem [resolvable:$true] %s32
      %35 = dma.hbm_to_vmem [thread:$0]  %s2, 128, %s33, [#allocation8]
    $region13: #{tpu_custom_call.1} parent=1 // pred_fallthru
      _
    // Predicated region
    $region14: #{tpu_custom_call.1} parent=1 // pred_check
      _
    $region15: #{tpu_custom_call.1} parent=1 // pred_check_branch
      %37 = sbr.rel (0) target = $region17
    $region16: #{tpu_custom_call.1} parent=1 // pred_region
      %38 = dma.done [#allocation5], 256
    $region17: #{tpu_custom_call.1} parent=1 // pred_fallthru
      _
    // Predicated region
    $region18: #{tpu_custom_call.1} parent=1 // pred_check
      _
    $region19: #{tpu_custom_call.1} parent=1 // pred_check_branch
      %40 = sbr.rel (0) target = $region21
    $region20: #{tpu_custom_call.1} parent=1 // pred_region
      %41 = dma.done [#allocation8], 128
    $region21: #{tpu_custom_call.1} parent=1 // pred_fallthru
      _
    %p42 = scmp.eq.s32.totalorder 0, 0
    // Predicated region
    $region22: #{tpu_custom_call.1} parent=1 // pred_check
      %p43 = pneg %p42
    $region23: #{tpu_custom_call.1} parent=1 // pred_check_branch
      %45 = sbr.rel (%p43) target = $region25
    $region24: #{tpu_custom_call.1} parent=1 // pred_region
      %vm46 = vcmask 261120
      %47 = vst.msk [vmem:[#allocation2] sm:$0xff] %vm46, 0.0
      %48 = vst.msk [vmem:[#allocation2 + $0x8] sm:$0xff] %vm46, 0.0
    $region25: #{tpu_custom_call.1} parent=1 // pred_fallthru
      _
    %v49 = vld [vmem:[#allocation2] sm:$0xff]
    %v50 = vld [vmem:[#allocation2 + $0x8] sm:$0xff]
    %v51 = vld [vmem:[#allocation4] sm:$0xff]
    %v52 = vld [vmem:[#allocation4 + $0x8] sm:$0xff]
    %v53 = vld [vmem:[#allocation7] sm:$0xff]
    %v54 = vunpack.c.0.s8 %v53
    %v55 = vunpack.c.1.s8 %v53
    %v56 = vunpack.c.2.s8 %v53
    %v57 = vunpack.c.3.s8 %v53
    %v58 = vcvt.s32.f32 %v54
    %v59 = vcvt.s32.f32 %v55
    %v60 = vcvt.s32.f32 %v56
    %v61 = vcvt.s32.f32 %v57
    %vm62 = vcmask 261120
    %v64 = vsel %vm62, %v51, 0
    %v67 = vsel %vm62, %v52, 0
    %69 = vmatprep.subr.mxu0 0.0
    %70 = vmatpush1.msra.mxu0 %v58
    %71 = vmatprep.subr.mxu0 0.0
    %72 = vmatpush1.msra.mxu0 %v59
    %73 = vmatprep.subr.mxu0 0.0
    %74 = vmatpush1.msra.mxu0 %v60
    %75 = vmatprep.subr.mxu0 0.0
    %76 = vmatpush1.msra.mxu0 %v61
    %77 = vmatprep.subr.mxu0 0.0
    %78 = vmatpush1.msra.mxu0 0.0
    %79 = vmatprep.subr.mxu0 0.0
    %80 = vmatpush1.msra.mxu0 0.0
    %81 = vmatprep.subr.mxu0 0.0
    %82 = vmatpush1.msra.mxu0 0.0
    %83 = vmatprep.subr.mxu0 0.0
    %84 = vmatpush1.msra.mxu0 0.0
    %85 = vmatprep.subr.mxu0 0.0
    %86 = vmatpush1.msra.mxu0 0.0
    %87 = vmatprep.subr.mxu0 0.0
    %88 = vmatpush1.msra.mxu0 0.0
    %89 = vmatprep.subr.mxu0 0.0
    %90 = vmatpush1.msra.mxu0 0.0
    %91 = vmatprep.subr.mxu0 0.0
    %92 = vmatpush1.msra.mxu0 0.0
    %93 = vmatprep.subr.mxu0 0.0
    %94 = vmatpush1.msra.mxu0 0.0
    %95 = vmatprep.subr.mxu0 0.0
    %96 = vmatpush1.msra.mxu0 0.0
    %97 = vmatprep.subr.mxu0 0.0
    %98 = vmatpush1.msra.mxu0 0.0
    %99 = vmatprep.subr.mxu0 0.0
    %100 = vmatpush1.msra.mxu0 0.0
    %101 = vmatprep.subr.mxu0 0.0
    %102 = vmatpush1.msra.mxu0 0.0
    %103 = vmatprep.subr.mxu0 0.0
    %104 = vmatpush1.msra.mxu0 0.0
    %105 = vmatprep.subr.mxu0 0.0
    %106 = vmatpush1.msra.mxu0 0.0
    %107 = vmatprep.subr.mxu0 0.0
    %108 = vmatpush1.msra.mxu0 0.0
    %109 = vmatprep.subr.mxu0 0.0
    %110 = vmatpush1.msra.mxu0 0.0
    %111 = vmatprep.subr.mxu0 0.0
    %112 = vmatpush1.msra.mxu0 0.0
    %113 = vmatprep.subr.mxu0 0.0
    %114 = vmatpush1.msra.mxu0 0.0
    %115 = vmatprep.subr.mxu0 0.0
    %116 = vmatpush1.msra.mxu0 0.0
    %117 = vmatprep.subr.mxu0 0.0
    %118 = vmatpush1.msra.mxu0 0.0
    %119 = vmatprep.subr.mxu0 0.0
    %120 = vmatpush1.msra.mxu0 0.0
    %121 = vmatprep.subr.mxu0 0.0
    %122 = vmatpush1.msra.mxu0 0.0
    %123 = vmatprep.subr.mxu0 0.0
    %124 = vmatpush1.msra.mxu0 0.0
    %125 = vmatprep.subr.mxu0 0.0
    %126 = vmatpush1.msra.mxu0 0.0
    %127 = vmatprep.subr.mxu0 0.0
    %128 = vmatpush1.msra.mxu0 0.0
    %129 = vmatprep.subr.mxu0 0.0
    %130 = vmatpush1.msra.mxu0 0.0
    %131 = vmatprep.subr.mxu0 0.0
    %132 = vmatpush1.msra.mxu0 0.0
    %133 = vmatprep.mubr.f32.mxu0 0.0
    %134 = vmatmul.mubr.f32.gmra.mrb[0].mxu0 %v64
    %v135 = vpop.f32.mrb[0].mxu0
    %v136 = vadd.f32 0.0, %v135
    %v137 = vpop.f32.mrb[0].mxu0
    %138 = vmatprep.mubr.f32.mxu0 0.0
    %139 = vmatmul.mubr.f32.gmra.mrb[0].mxu0 %v67
    %v140 = vpop.f32.mrb[0].mxu0
    %v141 = vadd.f32 0.0, %v140
    %v142 = vpop.f32.mrb[0].mxu0
    %143 = vdwg.mxu0
    %v144 = vadd.f32 %v49, %v136
    %v145 = vadd.f32 %v50, %v141
    %146 = vst.msk [vmem:[#allocation2] sm:$0xff] %vm62, %v144
    %147 = vst.msk [vmem:[#allocation2 + $0x8] sm:$0xff] %vm62, %v145
    // Predicated region
    $region26: #{tpu_custom_call.1} parent=1 // pred_check
      %p148 = pneg %p42
    $region27: #{tpu_custom_call.1} parent=1 // pred_check_branch
      %150 = sbr.rel (%p148) target = $region29
    $region28: #{tpu_custom_call.1} parent=1 // pred_region
      %v151 = vld [vmem:[#allocation2] sm:$0xff]
      %v152 = vld [vmem:[#allocation2 + $0x8] sm:$0xff]
      %s153 = sld [smem:[#allocation3]]
      %v154 = vstv %s153
      %v155 = vmul.f32 %v151, %v154
      %v156 = vmul.f32 %v152, %v154
      %157 = vst.msk [vmem:[#allocation9] sm:$0xff] %vm62, %v155
      %158 = vst.msk [vmem:[#allocation9 + $0x8] sm:$0xff] %vm62, %v156
    $region29: #{tpu_custom_call.1} parent=1 // pred_fallthru
      _
    // Predicated region
    $region30: #{tpu_custom_call.1} parent=1 // pred_check
      _
    $region31: #{tpu_custom_call.1} parent=1 // pred_check_branch
      %160 = sbr.rel (0) target = $region33
    $region32: #{tpu_custom_call.1} parent=1 // pred_region
      %s162 = ssub.s32 256, 256
      %163 = vsyncadd [#allocation6], %s162
      %s164 = sshll.u32 [#allocation9], 4
      %s165 = int_to_ptr.vmem [resolvable:$true] %s164
      %170 = dma.vmem_to_hbm [thread:$0]  %s165, 256, %s3, [#allocation6], 128, 128, 8
    $region33: #{tpu_custom_call.1} parent=1 // pred_fallthru
      _
    // Predicated region
    $region34: #{tpu_custom_call.1} parent=1 // pred_check
      _
    $region35: #{tpu_custom_call.1} parent=1 // pred_check_branch
      %172 = sbr.rel (0) target = $region37
    $region36: #{tpu_custom_call.1} parent=1 // pred_region
      %173 = dma.done [#allocation6], 256
    $region37: #{tpu_custom_call.1} parent=1 // pred_fallthru
      _
    %174 = vsyncpa [#allocation5], 1
    %175 = vsyncpa [#allocation8], 1
    %176 = vsyncpa [#allocation6], 1

</llo_original>
